<compile_context>
chip_gen: v5e
topology: v5e:2x2
jax: 0.10.0
libtpu: 0.0.40
codegen_flags: <defaults>
</compile_context>

<pallas_src>
import functools
import math

import jax
import jax.numpy as jnp
from jax import lax
from jax.experimental import pallas as pl
from jax.experimental.pallas import tpu as pltpu


# Large finite negative. Safe for causal self-attention (every query row always has at
# least one unmasked key in its first kv block); if reused with masks that can fully mask
# a row, the l==0 finalize division must be guarded.
_MASK_VALUE = -1e30


def _sublane_multiple(dtype):
    """Sublane-friendly tile step: 8 rows for f32, 16 for bf16, 32 for int8."""
    return max(8, 32 // jnp.dtype(dtype).itemsize)


def _pick_tile(n, preferred, multiples):
    """Largest tile <= preferred that divides n and is a multiple of one of `multiples`
    (tried in order, e.g. 128 first so the lane dim of s/p stays unmasked), else n."""
    if n <= preferred:
        return n
    for m in multiples:
        t = (preferred // m) * m
        while t >= m:
            if n % t == 0:
                return t
            t -= m
    return n


def _tile_prefs():
    """(tq_pref, tk_pref) per TPU generation.
    v5e: 4x128 MXU -> tk=128; 128 MiB VMEM -> big q tiles.
    v6e: 2x256 MXU, 128 MiB VMEM -> 256/256.
    v7x: 64 MiB VMEM -> keep tq modest; still tk=256."""
    try:
        kind = jax.devices()[0].device_kind.lower()
    except Exception:
        kind = ""
    if "v5 lite" in kind or "v5e" in kind or "v5lite" in kind:
        return 256, 128
    if "v7" in kind or "tpu7" in kind:
        return 128, 256
    return 256, 256


# ---------------------------------------------------------------------------
# Kernel 1: fused QKV projection, head-major (B, H, T, d) outputs.
# Full (D, D) de-interleaved weights have constant index maps -> fetched from HBM once
# and kept VMEM-resident for the whole grid.
# ---------------------------------------------------------------------------
def _qkv_proj_kernel(x_ref, wq_ref, wk_ref, wv_ref, bq_ref, bk_ref, bv_ref,
                     q_ref, k_ref, v_ref, *, num_heads, head_dim):
    x = x_ref[...]                                                     # (tm, D)
    q = jnp.dot(x, wq_ref[...], preferred_element_type=jnp.float32) + bq_ref[...]
    k = jnp.dot(x, wk_ref[...], preferred_element_type=jnp.float32) + bk_ref[...]
    v = jnp.dot(x, wv_ref[...], preferred_element_type=jnp.float32) + bv_ref[...]
    d = head_dim
    # Static per-head lane slices written head-major: one extra VMEM-local copy of the
    # outputs, which replaces the former host-side XLA transpose HBM round trip.
    for hh in range(num_heads):
        sl = slice(hh * d, (hh + 1) * d)
        q_ref[hh] = q[:, sl].astype(q_ref.dtype)
        k_ref[hh] = k[:, sl].astype(k_ref.dtype)
        v_ref[hh] = v[:, sl].astype(v_ref.dtype)


def _qkv_projection(x, wq, wk, wv, bq, bk, bv, *, num_heads, tm):
    B, T, D = x.shape
    H = num_heads
    d = D // H
    x_spec = pl.BlockSpec((None, tm, D), lambda b, i: (b, i, 0))
    w_spec = pl.BlockSpec((D, D), lambda b, i: (0, 0))     # constant index -> fetched once
    b_spec = pl.BlockSpec((1, D), lambda b, i: (0, 0))
    out_spec = pl.BlockSpec((None, H, tm, d), lambda b, i: (b, 0, i, 0))
    out_shape = jax.ShapeDtypeStruct((B, H, T, d), x.dtype)
    kernel = functools.partial(_qkv_proj_kernel, num_heads=H, head_dim=d)
    return pl.pallas_call(
        kernel,
        out_shape=(out_shape, out_shape, out_shape),
        grid_spec=pltpu.PrefetchScalarGridSpec(
            num_scalar_prefetch=0,
            grid=(B, T // tm),
            in_specs=[x_spec, w_spec, w_spec, w_spec, b_spec, b_spec, b_spec],
            out_specs=(out_spec, out_spec, out_spec),
        ),
        compiler_params=pltpu.CompilerParams(
            dimension_semantics=("parallel", "parallel")),
    )(x, wq, wk, wv, bq, bk, bv)


# ---------------------------------------------------------------------------
# Kernel 2: flash attention with an in-kernel causal kv sweep (manual double-buffered
# DMA, dynamic trip count) and a fused output projection using VMEM-resident Wo.
# Grid = (B, q_tiles, H); the output block index is constant across the (sequential)
# head axis, so the (tq, D) O-projection accumulator is finalized at h == H-1.
# ---------------------------------------------------------------------------
def _flash_attn_kernel(q_ref, k_hbm, v_hbm, wo_ref, bo_ref, o_ref,
                       kbuf, vbuf, sem, m_sc, l_sc, acc_sc, out_sc,
                       *, tq, tk, head_dim):
    b = pl.program_id(0)
    qi = pl.program_id(1)
    h = pl.program_id(2)
    n_h = pl.num_programs(2)
    d = head_dim

    q_first = qi * tq
    # Only kv blocks containing at least one key <= the last query row of this tile are
    # visited: above-diagonal blocks never exist (no grid step, no DMA, no overhead).
    n_kv = ((qi + 1) * tq + tk - 1) // tk

    def start_fetch(s, slot):
        start = pl.multiple_of(s * tk, tk)
        pltpu.make_async_copy(k_hbm.at[b, h, pl.ds(start, tk), :],
                              kbuf.at[slot], sem.at[0, slot]).start()
        pltpu.make_async_copy(v_hbm.at[b, h, pl.ds(start, tk), :],
                              vbuf.at[slot], sem.at[1, slot]).start()

    def wait_fetch(slot):
        # Any source view of the right shape works for the wait; the semaphore identifies
        # the transfer.
        pltpu.make_async_copy(k_hbm.at[b, h, pl.ds(0, tk), :],
                              kbuf.at[slot], sem.at[0, slot]).wait()
        pltpu.make_async_copy(v_hbm.at[b, h, pl.ds(0, tk), :],
                              vbuf.at[slot], sem.at[1, slot]).wait()

    start_fetch(0, 0)

    # Per-head online-softmax state: re-initialized every (b, qi, h) step.
    m_sc[...] = jnp.full_like(m_sc, _MASK_VALUE)
    l_sc[...] = jnp.zeros_like(l_sc)
    acc_sc[...] = jnp.zeros_like(acc_sc)

    @pl.when(h == 0)
    def _init_out():
        out_sc[...] = jnp.zeros_like(out_sc)

    q = q_ref[...]                                                        # (tq, d)
    # (tq, 1) row ids hoisted out of the kv loop (broadcasts are not CSE'd).
    row_ids = q_first + lax.broadcasted_iota(jnp.int32, (tq, 1), 0)

    @pl.loop(0, n_kv)
    def _kv_step(s):
        slot = s & 1
        wait_fetch(slot)

        @pl.when(s + 1 < n_kv)
        def _prefetch_next():
            start_fetch(s + 1, 1 - slot)

        k = kbuf[slot]                                                    # (tk, d)
        v = vbuf[slot]
        kv_first = s * tk

        def accumulate(apply_mask):
            # Contract on d directly (no materialized K transpose through the XLU).
            sc = lax.dot_general(q, k, (((1,), (1,)), ((), ())),
                                 preferred_element_type=jnp.float32)     # (tq, tk) f32
            if apply_mask:  # only diagonal-straddling blocks pay for the mask
                col_ids = kv_first + lax.broadcasted_iota(jnp.int32, (1, tk), 1)
                sc = jnp.where(col_ids > row_ids, _MASK_VALUE, sc)
            m_prev = m_sc[...]
            m_cur = jnp.maximum(m_prev, sc.max(axis=-1, keepdims=True))
            alpha = jnp.exp(m_prev - m_cur)
            p = jnp.exp(sc - m_cur)          # unnormalized; normalization at finalize
            l_sc[...] = alpha * l_sc[...] + p.sum(axis=-1, keepdims=True)
            acc_sc[...] = alpha * acc_sc[...] + jnp.dot(
                p.astype(v.dtype), v, preferred_element_type=jnp.float32)
            m_sc[...] = m_cur

        needs_mask = kv_first + tk - 1 > q_first

        @pl.when(needs_mask)
        def _diag_block():
            accumulate(True)

        @pl.when(jnp.logical_not(needs_mask))
        def _below_diag_block():
            accumulate(False)

    # Finalize this head: normalize once and fold it straight into the O-projection
    # accumulator, reading this head's rows from the VMEM-resident Wo.
    attn = acc_sc[...] * pl.reciprocal(l_sc[...], approx=True)           # (tq, d) f32
    wo_h = wo_ref[pl.ds(pl.multiple_of(h * d, d), d), :]                 # (d, D)
    out_sc[...] += jnp.dot(attn.astype(wo_ref.dtype), wo_h,
                           preferred_element_type=jnp.float32)

    @pl.when(h == n_h - 1)
    def _write_out():
        o_ref[...] = (out_sc[...] + bo_ref[...]).astype(o_ref.dtype)


def _flash_attention(q, k, v, wo, bo, *, tq, tk):
    B, H, T, d = q.shape
    D = wo.shape[1]
    n_q = T // tq

    kernel = functools.partial(_flash_attn_kernel, tq=tq, tk=tk, head_dim=d)

    itemsize = q.dtype.itemsize
    flops = 2 * B * H * T * T * d + 2 * B * T * D * D     # causal qk+pv (~half dense) + O-proj
    bytes_accessed = (3 * B * H * T * d + B * T * D + D * D + D) * itemsize

    return pl.pallas_call(
        kernel,
        out_shape=jax.ShapeDtypeStruct((B, T, D), q.dtype),
        grid_spec=pltpu.PrefetchScalarGridSpec(
            num_scalar_prefetch=0,
            grid=(B, n_q, H),
            in_specs=[
                pl.BlockSpec((None, None, tq, d), lambda b, i, h: (b, h, i, 0)),  # Q tile
                pl.BlockSpec(memory_space=pl.ANY),    # K: raw HBM, manual per-block DMA
                pl.BlockSpec(memory_space=pl.ANY),    # V: raw HBM, manual per-block DMA
                pl.BlockSpec((D, D), lambda b, i, h: (0, 0)),   # Wo: fetched once, resident
                pl.BlockSpec((1, D), lambda b, i, h: (0, 0)),   # bo
            ],
            out_specs=pl.BlockSpec((None, tq, D), lambda b, i, h: (b, i, 0)),
            scratch_shapes=[
                pltpu.VMEM((2, tk, d), k.dtype),      # K double buffer
                pltpu.VMEM((2, tk, d), v.dtype),      # V double buffer
                pltpu.SemaphoreType.DMA((2, 2)),      # [k|v, slot]
                pltpu.VMEM((tq, 1), jnp.float32),     # running max
                pltpu.VMEM((tq, 1), jnp.float32),     # running denominator
                pltpu.VMEM((tq, d), jnp.float32),     # per-head PV accumulator
                pltpu.VMEM((tq, D), jnp.float32),     # fused O-projection accumulator
            ],
        ),
        # B and q-tiles are parallel (megacore / v7x 2-TC sharding needs B*n_q >= 2);
        # heads are the sequential reduction axis for the fused O-projection.
        compiler_params=pltpu.CompilerParams(
            dimension_semantics=("parallel", "parallel", "arbitrary")),
        cost_estimate=pl.CostEstimate(
            flops=flops,
            transcendentals=B * H * T * T // 2,
            bytes_accessed=bytes_accessed),
    )(q, k, v, wo, bo)


# ---------------------------------------------------------------------------
# Public wrapper (matches the PyTorch forward; weights stored transposed: (in, out)).
# ---------------------------------------------------------------------------
def multi_head_attention(x, wqkv, bqkv, wo, bo, *, num_heads):
    """x: (B, T, D); wqkv: (D, 3D) interleaved per head as (H, 3, d); bqkv: (1, 3D);
    wo: (D, D); bo: (1, D)."""
    B, T, D = x.shape
    H = num_heads
    d = D // H
    assert D % H == 0 and (d % 8 == 0 or d == D), "head dim must be a multiple of 8"

    # Host-side layout plumbing (free): de-interleave W_qkv into head-major Wq|Wk|Wv and
    # fold the 1/sqrt(d) attention scale into the Q projection.
    scale = 1.0 / math.sqrt(d)
    w = wqkv.reshape(D, H, 3, d)
    b = bqkv.reshape(H, 3, d)
    wq = (w[:, :, 0, :] * scale).reshape(D, D).astype(x.dtype)
    wk = w[:, :, 1, :].reshape(D, D).astype(x.dtype)
    wv = w[:, :, 2, :].reshape(D, D).astype(x.dtype)
    bq = (b[:, 0, :] * scale).reshape(1, D).astype(x.dtype)
    bk = b[:, 1, :].reshape(1, D).astype(x.dtype)
    bv = b[:, 2, :].reshape(1, D).astype(x.dtype)

    # Generation- and dtype-aware tiles; tk kept a multiple of 128 when possible
    # (it is the lane dim of the score/probability tiles).
    tq_pref, tk_pref = _tile_prefs()
    sub = _sublane_multiple(x.dtype)
    tq = _pick_tile(T, tq_pref, (128, sub))
    tk = _pick_tile(T, tk_pref, (128, sub))

    # Head-major (B, H, T, d) Q/K/V straight out of the projection kernel.
    q, k, v = _qkv_projection(x, wq, wk, wv, bq, bk, bv, num_heads=H, tm=tq)
    out = _flash_attention(q, k, v, wo.astype(x.dtype), bo.astype(x.dtype), tq=tq, tk=tk)
    return out


def _reference(x, wqkv, bqkv, wo, bo, *, num_heads):
    """Pure-JAX mirror of the PyTorch forward (dropout = identity)."""
    B, T, D = x.shape
    d = D // num_heads
    qkv = x @ wqkv + bqkv[0]
    qkv = qkv.reshape(B, T, num_heads, 3, d)
    q = jnp.transpose(qkv[:, :, :, 0, :], (0, 2, 1, 3))
    k = jnp.transpose(qkv[:, :, :, 1, :], (0, 2, 1, 3))
    v = jnp.transpose(qkv[:, :, :, 2, :], (0, 2, 1, 3))
    s = jnp.einsum("bhqd,bhkd->bhqk", q, k) / math.sqrt(d)
    mask = jnp.triu(jnp.ones((T, T), dtype=bool), k=1)
    s = jnp.where(mask, -jnp.inf, s)
    p = jax.nn.softmax(s, axis=-1)
    o = jnp.einsum("bhqk,bhkd->bhqd", p, v)
    o = jnp.transpose(o, (0, 2, 1, 3)).reshape(B, T, D)
    return o @ wo + bo[0]


if __name__ == "__main__":
    def run_case(B, T, D, H, seed=0):
        key = jax.random.PRNGKey(seed)
        kx, k1, k2, k3, k4 = jax.random.split(key, 5)
        lim = 1.0 / math.sqrt(D)
        x = jax.random.normal(kx, (B, T, D), dtype=jnp.float32)
        wqkv = jax.random.uniform(k1, (D, 3 * D), jnp.float32, -lim, lim)  # stored as W^T
        bqkv = jax.random.uniform(k2, (1, 3 * D), jnp.float32, -lim, lim)
        wo = jax.random.uniform(k3, (D, D), jnp.float32, -lim, lim)
        bo = jax.random.uniform(k4, (1, D), jnp.float32, -lim, lim)

        out = jax.block_until_ready(
            multi_head_attention(x, wqkv, bqkv, wo, bo, num_heads=H))
        ref = _reference(x, wqkv, bqkv, wo, bo, num_heads=H)
        assert out.shape == (B, T, D)
        err = float(jnp.max(jnp.abs(out - ref)))
        assert jnp.allclose(out, ref, atol=2e-3, rtol=2e-3), f"mismatch: max|err|={err}"

    # module-scale tiny shapes: batch=2, seq=8, model_dim=32, heads=4 (attn_dim=8)
    run_case(2, 8, 32, 4)
    # small multi-tile case: exercises the in-kernel causal kv loop, the K/V DMA
    # double-buffering, diagonal-block masking, and the resident-Wo head slicing.
    run_case(2, 512, 128, 4, seed=1)

    print("KERNEL_OK")
</pallas_src>

<mosaic_0001>
module attributes {stable_mosaic.version = 11 : i64} {
  func.func @_qkv_proj_kernel(%arg0: i32, %arg1: i32, %arg2: memref<1x8x32xf32, #tpu.memory_space<vmem>>, %arg3: memref<32x32xf32, #tpu.memory_space<vmem>>, %arg4: memref<32x32xf32, #tpu.memory_space<vmem>>, %arg5: memref<32x32xf32, #tpu.memory_space<vmem>>, %arg6: memref<1x32xf32, #tpu.memory_space<vmem>>, %arg7: memref<1x32xf32, #tpu.memory_space<vmem>>, %arg8: memref<1x32xf32, #tpu.memory_space<vmem>>, %arg9: memref<1x4x8x8xf32, #tpu.memory_space<vmem>>, %arg10: memref<1x4x8x8xf32, #tpu.memory_space<vmem>>, %arg11: memref<1x4x8x8xf32, #tpu.memory_space<vmem>>) attributes {dimension_semantics = [#tpu.dimension_semantics<parallel>, #tpu.dimension_semantics<parallel>], iteration_bounds = array<i64: 2, 1>, scalar_prefetch = 0 : i64, scratch_operands = 0 : i64, tpu.core_type = #tpu.core_type<tc>, window_params = [{transform_indices = @transform_0, window_bounds = array<i64: 1, 8, 32>}, {pipeline_mode = #tpu.pipeline_mode<synchronous>, transform_indices = @transform_1, window_bounds = array<i64: 32, 32>}, {pipeline_mode = #tpu.pipeline_mode<synchronous>, transform_indices = @transform_2, window_bounds = array<i64: 32, 32>}, {pipeline_mode = #tpu.pipeline_mode<synchronous>, transform_indices = @transform_3, window_bounds = array<i64: 32, 32>}, {pipeline_mode = #tpu.pipeline_mode<synchronous>, transform_indices = @transform_4, window_bounds = array<i64: 1, 32>}, {pipeline_mode = #tpu.pipeline_mode<synchronous>, transform_indices = @transform_5, window_bounds = array<i64: 1, 32>}, {pipeline_mode = #tpu.pipeline_mode<synchronous>, transform_indices = @transform_6, window_bounds = array<i64: 1, 32>}, {transform_indices = @transform_7, window_bounds = array<i64: 1, 4, 8, 8>}, {transform_indices = @transform_8, window_bounds = array<i64: 1, 4, 8, 8>}, {transform_indices = @transform_9, window_bounds = array<i64: 1, 4, 8, 8>}]} {
    %c0 = arith.constant 0 : index
    %c0_0 = arith.constant 0 : index
    %c0_1 = arith.constant 0 : index
    %0 = vector.load %arg2[%c0, %c0_0, %c0_1] : memref<1x8x32xf32, #tpu.memory_space<vmem>>, vector<1x8x32xf32>
    %1 = vector.shape_cast %0 : vector<1x8x32xf32> to vector<8x32xf32>
    %c0_2 = arith.constant 0 : index
    %c0_3 = arith.constant 0 : index
    %2 = vector.load %arg3[%c0_2, %c0_3] : memref<32x32xf32, #tpu.memory_space<vmem>>, vector<32x32xf32>
    %cst = arith.constant dense<0.000000e+00> : vector<8x32xf32>
    %3 = tpu.matmul %1, %2, %cst {dimension_numbers = #tpu.dot_dimension_numbers<[1], [0], [0], [1], [0, 0, 1, 1], [], []>} : vector<8x32xf32>, vector<32x32xf32>, vector<8x32xf32> -> vector<8x32xf32>
    %c0_4 = arith.constant 0 : index
    %c0_5 = arith.constant 0 : index
    %4 = vector.load %arg6[%c0_4, %c0_5] : memref<1x32xf32, #tpu.memory_space<vmem>>, vector<1x32xf32>
    %5 = vector.broadcast %4 : vector<1x32xf32> to vector<8x32xf32>
    %6 = arith.addf %3, %5 : vector<8x32xf32>
    %c0_6 = arith.constant 0 : index
    %c0_7 = arith.constant 0 : index
    %7 = vector.load %arg4[%c0_6, %c0_7] : memref<32x32xf32, #tpu.memory_space<vmem>>, vector<32x32xf32>
    %cst_8 = arith.constant dense<0.000000e+00> : vector<8x32xf32>
    %8 = tpu.matmul %1, %7, %cst_8 {dimension_numbers = #tpu.dot_dimension_numbers<[1], [0], [0], [1], [0, 0, 1, 1], [], []>} : vector<8x32xf32>, vector<32x32xf32>, vector<8x32xf32> -> vector<8x32xf32>
    %c0_9 = arith.constant 0 : index
    %c0_10 = arith.constant 0 : index
    %9 = vector.load %arg7[%c0_9, %c0_10] : memref<1x32xf32, #tpu.memory_space<vmem>>, vector<1x32xf32>
    %10 = vector.broadcast %9 : vector<1x32xf32> to vector<8x32xf32>
    %11 = arith.addf %8, %10 : vector<8x32xf32>
    %c0_11 = arith.constant 0 : index
    %c0_12 = arith.constant 0 : index
    %12 = vector.load %arg5[%c0_11, %c0_12] : memref<32x32xf32, #tpu.memory_space<vmem>>, vector<32x32xf32>
    %cst_13 = arith.constant dense<0.000000e+00> : vector<8x32xf32>
    %13 = tpu.matmul %1, %12, %cst_13 {dimension_numbers = #tpu.dot_dimension_numbers<[1], [0], [0], [1], [0, 0, 1, 1], [], []>} : vector<8x32xf32>, vector<32x32xf32>, vector<8x32xf32> -> vector<8x32xf32>
    %c0_14 = arith.constant 0 : index
    %c0_15 = arith.constant 0 : index
    %14 = vector.load %arg8[%c0_14, %c0_15] : memref<1x32xf32, #tpu.memory_space<vmem>>, vector<1x32xf32>
    %15 = vector.broadcast %14 : vector<1x32xf32> to vector<8x32xf32>
    %16 = arith.addf %13, %15 : vector<8x32xf32>
    %17 = vector.extract_strided_slice %6 {offsets = [0, 0], sizes = [8, 8], strides = [1, 1]} : vector<8x32xf32> to vector<8x8xf32>
    %c0_16 = arith.constant 0 : index
    %c0_17 = arith.constant 0 : index
    %c0_18 = arith.constant 0 : index
    %c0_19 = arith.constant 0 : index
    %18 = vector.load %arg9[%c0_16, %c0_17, %c0_18, %c0_19] : memref<1x4x8x8xf32, #tpu.memory_space<vmem>>, vector<1x1x8x8xf32>
    %19 = vector.shape_cast %18 : vector<1x1x8x8xf32> to vector<8x8xf32>
    %20 = vector.shape_cast %17 : vector<8x8xf32> to vector<1x1x8x8xf32>
    tpu.vector_store %arg9[%c0_16, %c0_17, %c0_18, %c0_19], %20 {strides = array<i32>} : memref<1x4x8x8xf32, #tpu.memory_space<vmem>>, vector<1x1x8x8xf32>,
    %21 = vector.extract_strided_slice %11 {offsets = [0, 0], sizes = [8, 8], strides = [1, 1]} : vector<8x32xf32> to vector<8x8xf32>
    %c0_20 = arith.constant 0 : index
    %c0_21 = arith.constant 0 : index
    %c0_22 = arith.constant 0 : index
    %c0_23 = arith.constant 0 : index
    %22 = vector.load %arg10[%c0_20, %c0_21, %c0_22, %c0_23] : memref<1x4x8x8xf32, #tpu.memory_space<vmem>>, vector<1x1x8x8xf32>
    %23 = vector.shape_cast %22 : vector<1x1x8x8xf32> to vector<8x8xf32>
    %24 = vector.shape_cast %21 : vector<8x8xf32> to vector<1x1x8x8xf32>
    tpu.vector_store %arg10[%c0_20, %c0_21, %c0_22, %c0_23], %24 {strides = array<i32>} : memref<1x4x8x8xf32, #tpu.memory_space<vmem>>, vector<1x1x8x8xf32>,
    %25 = vector.extract_strided_slice %16 {offsets = [0, 0], sizes = [8, 8], strides = [1, 1]} : vector<8x32xf32> to vector<8x8xf32>
    %c0_24 = arith.constant 0 : index
    %c0_25 = arith.constant 0 : index
    %c0_26 = arith.constant 0 : index
    %c0_27 = arith.constant 0 : index
    %26 = vector.load %arg11[%c0_24, %c0_25, %c0_26, %c0_27] : memref<1x4x8x8xf32, #tpu.memory_space<vmem>>, vector<1x1x8x8xf32>
    %27 = vector.shape_cast %26 : vector<1x1x8x8xf32> to vector<8x8xf32>
    %28 = vector.shape_cast %25 : vector<8x8xf32> to vector<1x1x8x8xf32>
    tpu.vector_store %arg11[%c0_24, %c0_25, %c0_26, %c0_27], %28 {strides = array<i32>} : memref<1x4x8x8xf32, #tpu.memory_space<vmem>>, vector<1x1x8x8xf32>,
    %29 = vector.extract_strided_slice %6 {offsets = [0, 8], sizes = [8, 8], strides = [1, 1]} : vector<8x32xf32> to vector<8x8xf32>
    %c0_28 = arith.constant 0 : index
    %c1 = arith.constant 1 : index
    %c0_29 = arith.constant 0 : index
    %c0_30 = arith.constant 0 : index
    %30 = vector.load %arg9[%c0_28, %c1, %c0_29, %c0_30] : memref<1x4x8x8xf32, #tpu.memory_space<vmem>>, vector<1x1x8x8xf32>
    %31 = vector.shape_cast %30 : vector<1x1x8x8xf32> to vector<8x8xf32>
    %32 = vector.shape_cast %29 : vector<8x8xf32> to vector<1x1x8x8xf32>
    tpu.vector_store %arg9[%c0_28, %c1, %c0_29, %c0_30], %32 {strides = array<i32>} : memref<1x4x8x8xf32, #tpu.memory_space<vmem>>, vector<1x1x8x8xf32>,
    %33 = vector.extract_strided_slice %11 {offsets = [0, 8], sizes = [8, 8], strides = [1, 1]} : vector<8x32xf32> to vector<8x8xf32>
    %c0_31 = arith.constant 0 : index
    %c1_32 = arith.constant 1 : index
    %c0_33 = arith.constant 0 : index
    %c0_34 = arith.constant 0 : index
    %34 = vector.load %arg10[%c0_31, %c1_32, %c0_33, %c0_34] : memref<1x4x8x8xf32, #tpu.memory_space<vmem>>, vector<1x1x8x8xf32>
    %35 = vector.shape_cast %34 : vector<1x1x8x8xf32> to vector<8x8xf32>
    %36 = vector.shape_cast %33 : vector<8x8xf32> to vector<1x1x8x8xf32>
    tpu.vector_store %arg10[%c0_31, %c1_32, %c0_33, %c0_34], %36 {strides = array<i32>} : memref<1x4x8x8xf32, #tpu.memory_space<vmem>>, vector<1x1x8x8xf32>,
    %37 = vector.extract_strided_slice %16 {offsets = [0, 8], sizes = [8, 8], strides = [1, 1]} : vector<8x32xf32> to vector<8x8xf32>
    %c0_35 = arith.constant 0 : index
    %c1_36 = arith.constant 1 : index
    %c0_37 = arith.constant 0 : index
    %c0_38 = arith.constant 0 : index
    %38 = vector.load %arg11[%c0_35, %c1_36, %c0_37, %c0_38] : memref<1x4x8x8xf32, #tpu.memory_space<vmem>>, vector<1x1x8x8xf32>
    %39 = vector.shape_cast %38 : vector<1x1x8x8xf32> to vector<8x8xf32>
    %40 = vector.shape_cast %37 : vector<8x8xf32> to vector<1x1x8x8xf32>
    tpu.vector_store %arg11[%c0_35, %c1_36, %c0_37, %c0_38], %40 {strides = array<i32>} : memref<1x4x8x8xf32, #tpu.memory_space<vmem>>, vector<1x1x8x8xf32>,
    %41 = vector.extract_strided_slice %6 {offsets = [0, 16], sizes = [8, 8], strides = [1, 1]} : vector<8x32xf32> to vector<8x8xf32>
    %c0_39 = arith.constant 0 : index
    %c2 = arith.constant 2 : index
    %c0_40 = arith.constant 0 : index
    %c0_41 = arith.constant 0 : index
    %42 = vector.load %arg9[%c0_39, %c2, %c0_40, %c0_41] : memref<1x4x8x8xf32, #tpu.memory_space<vmem>>, vector<1x1x8x8xf32>
    %43 = vector.shape_cast %42 : vector<1x1x8x8xf32> to vector<8x8xf32>
    %44 = vector.shape_cast %41 : vector<8x8xf32> to vector<1x1x8x8xf32>
    tpu.vector_store %arg9[%c0_39, %c2, %c0_40, %c0_41], %44 {strides = array<i32>} : memref<1x4x8x8xf32, #tpu.memory_space<vmem>>, vector<1x1x8x8xf32>,
    %45 = vector.extract_strided_slice %11 {offsets = [0, 16], sizes = [8, 8], strides = [1, 1]} : vector<8x32xf32> to vector<8x8xf32>
    %c0_42 = arith.constant 0 : index
    %c2_43 = arith.constant 2 : index
    %c0_44 = arith.constant 0 : index
    %c0_45 = arith.constant 0 : index
    %46 = vector.load %arg10[%c0_42, %c2_43, %c0_44, %c0_45] : memref<1x4x8x8xf32, #tpu.memory_space<vmem>>, vector<1x1x8x8xf32>
    %47 = vector.shape_cast %46 : vector<1x1x8x8xf32> to vector<8x8xf32>
    %48 = vector.shape_cast %45 : vector<8x8xf32> to vector<1x1x8x8xf32>
    tpu.vector_store %arg10[%c0_42, %c2_43, %c0_44, %c0_45], %48 {strides = array<i32>} : memref<1x4x8x8xf32, #tpu.memory_space<vmem>>, vector<1x1x8x8xf32>,
    %49 = vector.extract_strided_slice %16 {offsets = [0, 16], sizes = [8, 8], strides = [1, 1]} : vector<8x32xf32> to vector<8x8xf32>
    %c0_46 = arith.constant 0 : index
    %c2_47 = arith.constant 2 : index
    %c0_48 = arith.constant 0 : index
    %c0_49 = arith.constant 0 : index
    %50 = vector.load %arg11[%c0_46, %c2_47, %c0_48, %c0_49] : memref<1x4x8x8xf32, #tpu.memory_space<vmem>>, vector<1x1x8x8xf32>
    %51 = vector.shape_cast %50 : vector<1x1x8x8xf32> to vector<8x8xf32>
    %52 = vector.shape_cast %49 : vector<8x8xf32> to vector<1x1x8x8xf32>
    tpu.vector_store %arg11[%c0_46, %c2_47, %c0_48, %c0_49], %52 {strides = array<i32>} : memref<1x4x8x8xf32, #tpu.memory_space<vmem>>, vector<1x1x8x8xf32>,
    %53 = vector.extract_strided_slice %6 {offsets = [0, 24], sizes = [8, 8], strides = [1, 1]} : vector<8x32xf32> to vector<8x8xf32>
    %c0_50 = arith.constant 0 : index
    %c3 = arith.constant 3 : index
    %c0_51 = arith.constant 0 : index
    %c0_52 = arith.constant 0 : index
    %54 = vector.load %arg9[%c0_50, %c3, %c0_51, %c0_52] : memref<1x4x8x8xf32, #tpu.memory_space<vmem>>, vector<1x1x8x8xf32>
    %55 = vector.shape_cast %54 : vector<1x1x8x8xf32> to vector<8x8xf32>
    %56 = vector.shape_cast %53 : vector<8x8xf32> to vector<1x1x8x8xf32>
    tpu.vector_store %arg9[%c0_50, %c3, %c0_51, %c0_52], %56 {strides = array<i32>} : memref<1x4x8x8xf32, #tpu.memory_space<vmem>>, vector<1x1x8x8xf32>,
    %57 = vector.extract_strided_slice %11 {offsets = [0, 24], sizes = [8, 8], strides = [1, 1]} : vector<8x32xf32> to vector<8x8xf32>
    %c0_53 = arith.constant 0 : index
    %c3_54 = arith.constant 3 : index
    %c0_55 = arith.constant 0 : index
    %c0_56 = arith.constant 0 : index
    %58 = vector.load %arg10[%c0_53, %c3_54, %c0_55, %c0_56] : memref<1x4x8x8xf32, #tpu.memory_space<vmem>>, vector<1x1x8x8xf32>
    %59 = vector.shape_cast %58 : vector<1x1x8x8xf32> to vector<8x8xf32>
    %60 = vector.shape_cast %57 : vector<8x8xf32> to vector<1x1x8x8xf32>
    tpu.vector_store %arg10[%c0_53, %c3_54, %c0_55, %c0_56], %60 {strides = array<i32>} : memref<1x4x8x8xf32, #tpu.memory_space<vmem>>, vector<1x1x8x8xf32>,
    %61 = vector.extract_strided_slice %16 {offsets = [0, 24], sizes = [8, 8], strides = [1, 1]} : vector<8x32xf32> to vector<8x8xf32>
    %c0_57 = arith.constant 0 : index
    %c3_58 = arith.constant 3 : index
    %c0_59 = arith.constant 0 : index
    %c0_60 = arith.constant 0 : index
    %62 = vector.load %arg11[%c0_57, %c3_58, %c0_59, %c0_60] : memref<1x4x8x8xf32, #tpu.memory_space<vmem>>, vector<1x1x8x8xf32>
    %63 = vector.shape_cast %62 : vector<1x1x8x8xf32> to vector<8x8xf32>
    %64 = vector.shape_cast %61 : vector<8x8xf32> to vector<1x1x8x8xf32>
    tpu.vector_store %arg11[%c0_57, %c3_58, %c0_59, %c0_60], %64 {strides = array<i32>} : memref<1x4x8x8xf32, #tpu.memory_space<vmem>>, vector<1x1x8x8xf32>,
    return
  }
  func.func @transform_0(%arg0: i32, %arg1: i32) -> (i32, i32, i32) {
    %c0_i32 = arith.constant 0 : i32
    %c0_i32_0 = arith.constant 0 : i32
    return %arg0, %arg1, %c0_i32 : i32, i32, i32
  }
  func.func @transform_1(%arg0: i32, %arg1: i32) -> (i32, i32) {
    %c0_i32 = arith.constant 0 : i32
    %c0_i32_0 = arith.constant 0 : i32
    %c0_i32_1 = arith.constant 0 : i32
    return %c0_i32, %c0_i32_0 : i32, i32
  }
  func.func @transform_2(%arg0: i32, %arg1: i32) -> (i32, i32) {
    %c0_i32 = arith.constant 0 : i32
    %c0_i32_0 = arith.constant 0 : i32
    %c0_i32_1 = arith.constant 0 : i32
    return %c0_i32, %c0_i32_0 : i32, i32
  }
  func.func @transform_3(%arg0: i32, %arg1: i32) -> (i32, i32) {
    %c0_i32 = arith.constant 0 : i32
    %c0_i32_0 = arith.constant 0 : i32
    %c0_i32_1 = arith.constant 0 : i32
    return %c0_i32, %c0_i32_0 : i32, i32
  }
  func.func @transform_4(%arg0: i32, %arg1: i32) -> (i32, i32) {
    %c0_i32 = arith.constant 0 : i32
    %c0_i32_0 = arith.constant 0 : i32
    %c0_i32_1 = arith.constant 0 : i32
    return %c0_i32, %c0_i32_0 : i32, i32
  }
  func.func @transform_5(%arg0: i32, %arg1: i32) -> (i32, i32) {
    %c0_i32 = arith.constant 0 : i32
    %c0_i32_0 = arith.constant 0 : i32
    %c0_i32_1 = arith.constant 0 : i32
    return %c0_i32, %c0_i32_0 : i32, i32
  }
  func.func @transform_6(%arg0: i32, %arg1: i32) -> (i32, i32) {
    %c0_i32 = arith.constant 0 : i32
    %c0_i32_0 = arith.constant 0 : i32
    %c0_i32_1 = arith.constant 0 : i32
    return %c0_i32, %c0_i32_0 : i32, i32
  }
  func.func @transform_7(%arg0: i32, %arg1: i32) -> (i32, i32, i32, i32) {
    %c0_i32 = arith.constant 0 : i32
    %c0_i32_0 = arith.constant 0 : i32
    %c0_i32_1 = arith.constant 0 : i32
    return %arg0, %c0_i32, %arg1, %c0_i32_0 : i32, i32, i32, i32
  }
  func.func @transform_8(%arg0: i32, %arg1: i32) -> (i32, i32, i32, i32) {
    %c0_i32 = arith.constant 0 : i32
    %c0_i32_0 = arith.constant 0 : i32
    %c0_i32_1 = arith.constant 0 : i32
    return %arg0, %c0_i32, %arg1, %c0_i32_0 : i32, i32, i32, i32
  }
  func.func @transform_9(%arg0: i32, %arg1: i32) -> (i32, i32, i32, i32) {
    %c0_i32 = arith.constant 0 : i32
    %c0_i32_0 = arith.constant 0 : i32
    %c0_i32_1 = arith.constant 0 : i32
    return %arg0, %c0_i32, %arg1, %c0_i32_0 : i32, i32, i32, i32
  }
}

</mosaic_0001>

<llo_original>
// kernel: tpu_custom_call.1
$region0: #{tpu_custom_call.1}
  #allocation0 [shape = 'u32[]', space=smem, size = 0x4, offset = 0x4, fixed_abs, tag = 'smem constant byte address 0x4 - core index']
  #allocation1 [shape = 'u32[72,128]{1,0:T(1,128)}', space=vmem, size = 0x9000, scoped, tag = 'internal scratch']
  %s0 = inlined_call_operand.hbm [shape: f32[2,8,32], index: 0, kind: input, shape index: {}]
  %s1 = inlined_call_operand.hbm [shape: f32[32,32], index: 1, kind: input, shape index: {}]
  %s2 = inlined_call_operand.hbm [shape: f32[32,32], index: 2, kind: input, shape index: {}]
  %s3 = inlined_call_operand.hbm [shape: f32[32,32], index: 3, kind: input, shape index: {}]
  %s4 = inlined_call_operand.vmem [shape: f32[1,32], index: 4, kind: input, shape index: {}]
  %s5 = inlined_call_operand.vmem [shape: f32[1,32], index: 5, kind: input, shape index: {}]
  %s6 = inlined_call_operand.vmem [shape: f32[1,32], index: 6, kind: input, shape index: {}]
  %s7 = inlined_call_operand.hbm [shape: f32[2,4,8,8], index: 7, kind: output, shape index: {0}]
  %s8 = inlined_call_operand.hbm [shape: f32[2,4,8,8], index: 8, kind: output, shape index: {1}]
  %s9 = inlined_call_operand.hbm [shape: f32[2,4,8,8], index: 9, kind: output, shape index: {2}]
  %10 = xla_tuple %s7, %s8, %s9
  %s11 = sld [smem:[#allocation0]]
  $region93: #{tpu_custom_call.1} parent=0
    _
  %s13 = ssub.s32 1, %s11
  %s14 = scalar_select 0, %s13, %s11
  $region1: #{tpu_custom_call.1} parent=0
    #allocation2 [shape = 'u8[8192]{0}', space=vmem, size = 0x2000, scoped, tag = 'input window, operand 0']
    #allocation3 [shape = 's32[2]{0}', space=sflag, size = 0x8, scoped, tag = 'scoped memory for tpu_custom_call.1']
    #allocation4 [shape = 's32[2]{0}', space=sflag, size = 0x8, scoped, tag = 'scoped memory for tpu_custom_call.1']
    #allocation5 [shape = 'u8[16384]{0}', space=vmem, size = 0x4000, scoped, tag = 'input window, operand 1, single buffered']
    #allocation6 [shape = 's32[1]{0}', space=sflag, size = 0x4, scoped, tag = 'scoped memory for tpu_custom_call.1']
    #allocation7 [shape = 'u8[16384]{0}', space=vmem, size = 0x4000, scoped, tag = 'input window, operand 2, single buffered']
    #allocation8 [shape = 'u8[16384]{0}', space=vmem, size = 0x4000, scoped, tag = 'input window, operand 3, single buffered']
    #allocation9 [shape = 's32[1]{0}', space=sflag, size = 0x4, scoped, tag = 'scoped memory for tpu_custom_call.1']
    #allocation10 [shape = 'u8[32768]{0}', space=vmem, size = 0x8000, scoped, tag = 'output window, operand 0']
    #allocation11 [shape = 'u8[32768]{0}', space=vmem, size = 0x8000, scoped, tag = 'output window, operand 1']
    #allocation12 [shape = 's32[2]{0}', space=sflag, size = 0x8, scoped, tag = 'scoped memory for tpu_custom_call.1']
    #allocation13 [shape = 'u8[32768]{0}', space=vmem, size = 0x8000, scoped, tag = 'output window, operand 2']
    %15 = vsyncpa [#allocation3], 0
    %s16 = scalar_lea.sflag [#allocation3], 1
    %17 = vsyncpa %s16, 0
    %18 = vsyncpa [#allocation6], 0
    %19 = vsyncpa [#allocation9], 0
    %20 = vsyncpa [#allocation4], 0
    %s21 = scalar_lea.sflag [#allocation4], 1
    %22 = vsyncpa %s21, 0
    %23 = vsyncpa [#allocation12], 0
    %s24 = scalar_lea.sflag [#allocation12], 1
    %25 = vsyncpa %s24, 0
    loop: start=0, step=1, limit=4
    $region2: #{tpu_custom_call.1} parent=1 // loop_pre_header
      _
    $region3: #{tpu_custom_call.1} parent=1 // loop_header
      %s27 = sphi 0, %s31
      %p28 = scmp.ge.s32.totalorder %s27, 4
      %s34 = sphi 0, %s46
      %s35 = sphi 0, %s42
      %s36 = sphi 0, %s34
      %s37 = sphi 0, %s35
      %s38 = sphi 0, %s36
      %s39 = sphi 0, %s37
      %s51 = sphi 0, %s53
      %s54 = sphi 0, %s51
      %s55 = sphi 0, %s54
      %s71 = sphi 0, %s55
      %s75 = sphi 0, %s75
      %s77 = sphi 0, %s75
      %s78 = sphi 0, %s77
      %s92 = sphi 0, %s78
      %s96 = sphi 0, %s96
      %s98 = sphi 0, %s96
      %s99 = sphi 0, %s98
      %s113 = sphi 0, %s99
      %s117 = sphi 0, %s117
      %s119 = sphi 0, %s117
      %s120 = sphi 0, %s119
      %s134 = sphi 0, %s120
      %s138 = sphi 0, %s138
      %s140 = sphi 0, %s138
      %s141 = sphi 0, %s140
      %s155 = sphi 0, %s141
      %s159 = sphi 0, %s159
      %s161 = sphi 0, %s159
      %s162 = sphi 0, %s161
      %s176 = sphi 0, %s162
      %s180 = sphi 0, %s180
      %s182 = sphi 0, %s180
      %s183 = sphi 0, %s182
      %s197 = sphi 0, %s183
      %s205 = sphi 0, %s207
      %s208 = sphi 0, %s205
      %s209 = sphi 0, %s208
      %s225 = sphi 0, %s209
      %s233 = sphi 0, %s235
      %s236 = sphi 0, %s233
      %s237 = sphi 0, %s236
      %s253 = sphi 0, %s237
      %s261 = sphi 0, %s263
      %s264 = sphi 0, %s261
      %s265 = sphi 0, %s264
      %s281 = sphi 0, %s265
    $region4: #{tpu_custom_call.1} parent=1 // loop_header_branch
      %30 = sbr.rel (%p28) target = $region8
    $region5: #{tpu_custom_call.1} parent=1 // loop_body
      %s32 = ssub.s32 %s27, 1
      %s33 = ssub.s32 %s27, 2
      %s40 = sadd.s32 1, %s35
      %p41 = scmp.ge.s32.totalorder %s40, 1
      %s42 = scalar_select %p41, 0, %s40
      %s43 = sadd.s32 1, %s34
      %s44 = scalar_select %p41, %s43, %s34
      %p45 = scmp.ge.s32.totalorder %s44, 2
      %s46 = scalar_select %p45, 0, %s44
      %s47 = ssub.s32 %s34, %s46
      %s48 = ssub.s32 %s35, %s42
      %s49 = sor.u32 %s47, %s48
      %p50 = scmp.eq.s32.totalorder %s49, 0
      %s52 = sadd.s32 %s51, 1
      %s53 = scalar_select %p50, %s51, %s52
      %p56 = pneg %p50
      %p57 = scmp.eq.s32.totalorder %s27, 1
      %p58 = por %p56, %p57
      %p59 = scmp.ne.s32.totalorder %s51, %s54
      %p60 = scmp.eq.s32.totalorder %s27, 0
      %p61 = por %p59, %p60
      %p62 = scmp.ne.s32.totalorder %s51, %s54
      %p63 = scmp.eq.s32.totalorder %s32, 1
      %p64 = por %p62, %p63
      %p65 = scmp.ne.s32.totalorder %s54, %s55
      %p66 = scmp.eq.s32.totalorder %s32, 0
      %p67 = por %p65, %p66
      %p68 = scmp.ne.s32.totalorder %s54, %s55
      %p69 = scmp.eq.s32.totalorder %s33, 1
      %p70 = por %p68, %p69
      %p72 = scmp.ne.s32.totalorder %s55, %s71
      %p73 = scmp.eq.s32.totalorder %s33, 0
      %p74 = por %p72, %p73
      %s76 = sadd.s32 %s75, 1
      %p79 = scmp.eq.s32.totalorder %s27, 1
      %p80 = scmp.ne.s32.totalorder %s75, %s77
      %p81 = scmp.eq.s32.totalorder %s27, 0
      %p82 = por %p80, %p81
      %p83 = scmp.ne.s32.totalorder %s75, %s77
      %p84 = scmp.eq.s32.totalorder %s32, 1
      %p85 = por %p83, %p84
      %p86 = scmp.ne.s32.totalorder %s77, %s78
      %p87 = scmp.eq.s32.totalorder %s32, 0
      %p88 = por %p86, %p87
      %p89 = scmp.ne.s32.totalorder %s77, %s78
      %p90 = scmp.eq.s32.totalorder %s33, 1
      %p91 = por %p89, %p90
      %p93 = scmp.ne.s32.totalorder %s78, %s92
      %p94 = scmp.eq.s32.totalorder %s33, 0
      %p95 = por %p93, %p94
      %s97 = sadd.s32 %s96, 1
      %p100 = scmp.eq.s32.totalorder %s27, 1
      %p101 = scmp.ne.s32.totalorder %s96, %s98
      %p102 = scmp.eq.s32.totalorder %s27, 0
      %p103 = por %p101, %p102
      %p104 = scmp.ne.s32.totalorder %s96, %s98
      %p105 = scmp.eq.s32.totalorder %s32, 1
      %p106 = por %p104, %p105
      %p107 = scmp.ne.s32.totalorder %s98, %s99
      %p108 = scmp.eq.s32.totalorder %s32, 0
      %p109 = por %p107, %p108
      %p110 = scmp.ne.s32.totalorder %s98, %s99
      %p111 = scmp.eq.s32.totalorder %s33, 1
      %p112 = por %p110, %p111
      %p114 = scmp.ne.s32.totalorder %s99, %s113
      %p115 = scmp.eq.s32.totalorder %s33, 0
      %p116 = por %p114, %p115
      %s118 = sadd.s32 %s117, 1
      %p121 = scmp.eq.s32.totalorder %s27, 1
      %p122 = scmp.ne.s32.totalorder %s117, %s119
      %p123 = scmp.eq.s32.totalorder %s27, 0
      %p124 = por %p122, %p123
      %p125 = scmp.ne.s32.totalorder %s117, %s119
      %p126 = scmp.eq.s32.totalorder %s32, 1
      %p127 = por %p125, %p126
      %p128 = scmp.ne.s32.totalorder %s119, %s120
      %p129 = scmp.eq.s32.totalorder %s32, 0
      %p130 = por %p128, %p129
      %p131 = scmp.ne.s32.totalorder %s119, %s120
      %p132 = scmp.eq.s32.totalorder %s33, 1
      %p133 = por %p131, %p132
      %p135 = scmp.ne.s32.totalorder %s120, %s134
      %p136 = scmp.eq.s32.totalorder %s33, 0
      %p137 = por %p135, %p136
      %s139 = sadd.s32 %s138, 1
      %p142 = scmp.eq.s32.totalorder %s27, 1
      %p143 = scmp.ne.s32.totalorder %s138, %s140
      %p144 = scmp.eq.s32.totalorder %s27, 0
      %p145 = por %p143, %p144
      %p146 = scmp.ne.s32.totalorder %s138, %s140
      %p147 = scmp.eq.s32.totalorder %s32, 1
      %p148 = por %p146, %p147
      %p149 = scmp.ne.s32.totalorder %s140, %s141
      %p150 = scmp.eq.s32.totalorder %s32, 0
      %p151 = por %p149, %p150
      %p152 = scmp.ne.s32.totalorder %s140, %s141
      %p153 = scmp.eq.s32.totalorder %s33, 1
      %p154 = por %p152, %p153
      %p156 = scmp.ne.s32.totalorder %s141, %s155
      %p157 = scmp.eq.s32.totalorder %s33, 0
      %p158 = por %p156, %p157
      %s160 = sadd.s32 %s159, 1
      %p163 = scmp.eq.s32.totalorder %s27, 1
      %p164 = scmp.ne.s32.totalorder %s159, %s161
      %p165 = scmp.eq.s32.totalorder %s27, 0
      %p166 = por %p164, %p165
      %p167 = scmp.ne.s32.totalorder %s159, %s161
      %p168 = scmp.eq.s32.totalorder %s32, 1
      %p169 = por %p167, %p168
      %p170 = scmp.ne.s32.totalorder %s161, %s162
      %p171 = scmp.eq.s32.totalorder %s32, 0
      %p172 = por %p170, %p171
      %p173 = scmp.ne.s32.totalorder %s161, %s162
      %p174 = scmp.eq.s32.totalorder %s33, 1
      %p175 = por %p173, %p174
      %p177 = scmp.ne.s32.totalorder %s162, %s176
      %p178 = scmp.eq.s32.totalorder %s33, 0
      %p179 = por %p177, %p178
      %s181 = sadd.s32 %s180, 1
      %p184 = scmp.eq.s32.totalorder %s27, 1
      %p185 = scmp.ne.s32.totalorder %s180, %s182
      %p186 = scmp.eq.s32.totalorder %s27, 0
      %p187 = por %p185, %p186
      %p188 = scmp.ne.s32.totalorder %s180, %s182
      %p189 = scmp.eq.s32.totalorder %s32, 1
      %p190 = por %p188, %p189
      %p191 = scmp.ne.s32.totalorder %s182, %s183
      %p192 = scmp.eq.s32.totalorder %s32, 0
      %p193 = por %p191, %p192
      %p194 = scmp.ne.s32.totalorder %s182, %s183
      %p195 = scmp.eq.s32.totalorder %s33, 1
      %p196 = por %p194, %p195
      %p198 = scmp.ne.s32.totalorder %s183, %s197
      %p199 = scmp.eq.s32.totalorder %s33, 0
      %p200 = por %p198, %p199
      %s201 = ssub.s32 %s34, %s46
      %s202 = ssub.s32 %s35, %s42
      %s203 = sor.u32 %s201, %s202
      %p204 = scmp.eq.s32.totalorder %s203, 0
      %s206 = sadd.s32 %s205, 1
      %s207 = scalar_select %p204, %s205, %s206
      %p210 = pneg %p204
      %p211 = scmp.eq.s32.totalorder %s27, 1
      %p212 = por %p210, %p211
      %p213 = scmp.ne.s32.totalorder %s205, %s208
      %p214 = scmp.eq.s32.totalorder %s27, 0
      %p215 = por %p213, %p214
      %p216 = scmp.ne.s32.totalorder %s205, %s208
      %p217 = scmp.eq.s32.totalorder %s32, 1
      %p218 = por %p216, %p217
      %p219 = scmp.ne.s32.totalorder %s208, %s209
      %p220 = scmp.eq.s32.totalorder %s32, 0
      %p221 = por %p219, %p220
      %p222 = scmp.ne.s32.totalorder %s208, %s209
      %p223 = scmp.eq.s32.totalorder %s33, 1
      %p224 = por %p222, %p223
      %p226 = scmp.ne.s32.totalorder %s209, %s225
      %p227 = scmp.eq.s32.totalorder %s33, 0
      %p228 = por %p226, %p227
      %s229 = ssub.s32 %s34, %s46
      %s230 = ssub.s32 %s35, %s42
      %s231 = sor.u32 %s229, %s230
      %p232 = scmp.eq.s32.totalorder %s231, 0
      %s234 = sadd.s32 %s233, 1
      %s235 = scalar_select %p232, %s233, %s234
      %p238 = pneg %p232
      %p239 = scmp.eq.s32.totalorder %s27, 1
      %p240 = por %p238, %p239
      %p241 = scmp.ne.s32.totalorder %s233, %s236
      %p242 = scmp.eq.s32.totalorder %s27, 0
      %p243 = por %p241, %p242
      %p244 = scmp.ne.s32.totalorder %s233, %s236
      %p245 = scmp.eq.s32.totalorder %s32, 1
      %p246 = por %p244, %p245
      %p247 = scmp.ne.s32.totalorder %s236, %s237
      %p248 = scmp.eq.s32.totalorder %s32, 0
      %p249 = por %p247, %p248
      %p250 = scmp.ne.s32.totalorder %s236, %s237
      %p251 = scmp.eq.s32.totalorder %s33, 1
      %p252 = por %p250, %p251
      %p254 = scmp.ne.s32.totalorder %s237, %s253
      %p255 = scmp.eq.s32.totalorder %s33, 0
      %p256 = por %p254, %p255
      %s257 = ssub.s32 %s34, %s46
      %s258 = ssub.s32 %s35, %s42
      %s259 = sor.u32 %s257, %s258
      %p260 = scmp.eq.s32.totalorder %s259, 0
      %s262 = sadd.s32 %s261, 1
      %s263 = scalar_select %p260, %s261, %s262
      %p266 = pneg %p260
      %p267 = scmp.eq.s32.totalorder %s27, 1
      %p268 = por %p266, %p267
      %p269 = scmp.ne.s32.totalorder %s261, %s264
      %p270 = scmp.eq.s32.totalorder %s27, 0
      %p271 = por %p269, %p270
      %p272 = scmp.ne.s32.totalorder %s261, %s264
      %p273 = scmp.eq.s32.totalorder %s32, 1
      %p274 = por %p272, %p273
      %p275 = scmp.ne.s32.totalorder %s264, %s265
      %p276 = scmp.eq.s32.totalorder %s32, 0
      %p277 = por %p275, %p276
      %p278 = scmp.ne.s32.totalorder %s264, %s265
      %p279 = scmp.eq.s32.totalorder %s33, 1
      %p280 = por %p278, %p279
      %p282 = scmp.ne.s32.totalorder %s265, %s281
      %p283 = scmp.eq.s32.totalorder %s33, 0
      %p284 = por %p282, %p283
      %p285 = scmp.le.s32.totalorder 1, %s27
      %p286 = scmp.lt.s32.totalorder %s27, 3
      %p287 = pnand %p285, %p286
      %p288 = pneg %p287
      // Predicated region
      $region9: #{tpu_custom_call.1} parent=5 // pred_check
        _
      $region10: #{tpu_custom_call.1} parent=5 // pred_check_branch
        %290 = sbr.rel (%p287) target = $region12
      $region11: #{tpu_custom_call.1} parent=5 // pred_region
        %s291 = ssub.s32 %s27, 1
        // Predicated region
        $region13: #{tpu_custom_call.1} parent=11 // pred_check
          %p292 = pneg %p88
        $region14: #{tpu_custom_call.1} parent=11 // pred_check_branch
          %294 = sbr.rel (%p292) target = $region16
        $region15: #{tpu_custom_call.1} parent=11 // pred_region
          %296 = vsyncadd [#allocation6], 0
          %s297 = sshll.u32 %s1, 4
          %s298 = int_to_ptr.hbm [resolvable:$true] %s297
          %s299 = sshll.u32 [#allocation5], 4
          %s300 = int_to_ptr.vmem [resolvable:$true] %s299
          %305 = dma.hbm_to_vmem [thread:$0]  %s298, 512, %s300, [#allocation6], 128, 128, 8
        $region16: #{tpu_custom_call.1} parent=11 // pred_fallthru
          _
        // Predicated region
        $region17: #{tpu_custom_call.1} parent=11 // pred_check
          %p306 = pneg %p109
        $region18: #{tpu_custom_call.1} parent=11 // pred_check_branch
          %308 = sbr.rel (%p306) target = $region20
        $region19: #{tpu_custom_call.1} parent=11 // pred_region
          %310 = vsyncadd [#allocation6], 0
          %s311 = sshll.u32 %s2, 4
          %s312 = int_to_ptr.hbm [resolvable:$true] %s311
          %s313 = sshll.u32 [#allocation7], 4
          %s314 = int_to_ptr.vmem [resolvable:$true] %s313
          %319 = dma.hbm_to_vmem [thread:$0]  %s312, 512, %s314, [#allocation6], 128, 128, 8
        $region20: #{tpu_custom_call.1} parent=11 // pred_fallthru
          _
        // Predicated region
        $region21: #{tpu_custom_call.1} parent=11 // pred_check
          %p320 = pneg %p130
        $region22: #{tpu_custom_call.1} parent=11 // pred_check_branch
          %322 = sbr.rel (%p320) target = $region24
        $region23: #{tpu_custom_call.1} parent=11 // pred_region
          %324 = vsyncadd [#allocation9], 0
          %s325 = sshll.u32 %s3, 4
          %s326 = int_to_ptr.hbm [resolvable:$true] %s325
          %s327 = sshll.u32 [#allocation8], 4
          %s328 = int_to_ptr.vmem [resolvable:$true] %s327
          %333 = dma.hbm_to_vmem [thread:$0]  %s326, 512, %s328, [#allocation9], 128, 128, 8
        $region24: #{tpu_custom_call.1} parent=11 // pred_fallthru
          _
        // Predicated region
        $region25: #{tpu_custom_call.1} parent=11 // pred_check
          %p334 = pneg %p151
        $region26: #{tpu_custom_call.1} parent=11 // pred_check_branch
          %336 = sbr.rel (%p334) target = $region28
        $region27: #{tpu_custom_call.1} parent=11 // pred_region
          _
        $region28: #{tpu_custom_call.1} parent=11 // pred_fallthru
          _
        // Predicated region
        $region29: #{tpu_custom_call.1} parent=11 // pred_check
          %p337 = pneg %p172
        $region30: #{tpu_custom_call.1} parent=11 // pred_check_branch
          %339 = sbr.rel (%p337) target = $region32
        $region31: #{tpu_custom_call.1} parent=11 // pred_region
          _
        $region32: #{tpu_custom_call.1} parent=11 // pred_fallthru
          _
        // Predicated region
        $region33: #{tpu_custom_call.1} parent=11 // pred_check
          %p340 = pneg %p193
        $region34: #{tpu_custom_call.1} parent=11 // pred_check_branch
          %342 = sbr.rel (%p340) target = $region36
        $region35: #{tpu_custom_call.1} parent=11 // pred_region
          _
        $region36: #{tpu_custom_call.1} parent=11 // pred_fallthru
          _
      $region12: #{tpu_custom_call.1} parent=5 // pred_fallthru
        _
      %p343 = scmp.lt.s32.totalorder %s27, 2
      // Predicated region
      $region37: #{tpu_custom_call.1} parent=5 // pred_check
        %p344 = pneg %p343
      $region38: #{tpu_custom_call.1} parent=5 // pred_check_branch
        %346 = sbr.rel (%p344) target = $region40
      $region39: #{tpu_custom_call.1} parent=5 // pred_region
        // Predicated region
        $region41: #{tpu_custom_call.1} parent=39 // pred_check
          %p347 = pneg %p61
        $region42: #{tpu_custom_call.1} parent=39 // pred_check_branch
          %349 = sbr.rel (%p347) target = $region44
        $region43: #{tpu_custom_call.1} parent=39 // pred_region
          %s350 = sand.u32 %s51, 1
          %s351 = scalar_lea.sflag [#allocation3], %s350
          %s352 = sand.u32 %s51, 1
          %s353 = smul.addr %s352, 8
          %s354 = scalar_lea.vmem [#allocation2], %s353
          %356 = vsyncadd %s351, 0
          %s357 = sadd.s32 %s35, %s34
          %s358 = smul.addr %s357, 8
          %s359 = scalar_lea.hbm %s0, %s358
          %s361 = sshll.u32 %s359, 4
          %s362 = int_to_ptr.hbm [resolvable:$true] %s361
          %s363 = sshll.u32 %s354, 4
          %s364 = int_to_ptr.vmem [resolvable:$true] %s363
          %366 = dma.hbm_to_vmem [thread:$0]  %s362, 128, %s364, %s351
        $region44: #{tpu_custom_call.1} parent=39 // pred_fallthru
          _
      $region40: #{tpu_custom_call.1} parent=5 // pred_fallthru
        _
      %p367 = scmp.le.s32.totalorder 1, %s27
      %p368 = scmp.lt.s32.totalorder %s27, 3
      %p369 = pnand %p367, %p368
      %p370 = pneg %p369
      // Predicated region
      $region45: #{tpu_custom_call.1} parent=5 // pred_check
        _
      $region46: #{tpu_custom_call.1} parent=5 // pred_check_branch
        %372 = sbr.rel (%p369) target = $region48
      $region47: #{tpu_custom_call.1} parent=5 // pred_region
        %s373 = ssub.s32 %s27, 1
        %s374 = sand.u32 %s54, 1
        %s375 = scalar_lea.sflag [#allocation3], %s374
        %s376 = sand.u32 %s54, 1
        %s377 = smul.addr %s376, 8
        %s378 = scalar_lea.vmem [#allocation2], %s377
        // Predicated region
        $region49: #{tpu_custom_call.1} parent=47 // pred_check
          %p379 = pneg %p67
        $region50: #{tpu_custom_call.1} parent=47 // pred_check_branch
          %381 = sbr.rel (%p379) target = $region52
        $region51: #{tpu_custom_call.1} parent=47 // pred_region
          %383 = dma.done %s375, 128
        $region52: #{tpu_custom_call.1} parent=47 // pred_fallthru
          _
        // Predicated region
        $region53: #{tpu_custom_call.1} parent=47 // pred_check
          %p384 = pneg %p88
        $region54: #{tpu_custom_call.1} parent=47 // pred_check_branch
          %386 = sbr.rel (%p384) target = $region56
        $region55: #{tpu_custom_call.1} parent=47 // pred_region
          %388 = dma.done [#allocation6], 512
        $region56: #{tpu_custom_call.1} parent=47 // pred_fallthru
          _
        // Predicated region
        $region57: #{tpu_custom_call.1} parent=47 // pred_check
          %p389 = pneg %p109
        $region58: #{tpu_custom_call.1} parent=47 // pred_check_branch
          %391 = sbr.rel (%p389) target = $region60
        $region59: #{tpu_custom_call.1} parent=47 // pred_region
          %393 = dma.done [#allocation6], 512
        $region60: #{tpu_custom_call.1} parent=47 // pred_fallthru
          _
        // Predicated region
        $region61: #{tpu_custom_call.1} parent=47 // pred_check
          %p394 = pneg %p130
        $region62: #{tpu_custom_call.1} parent=47 // pred_check_branch
          %396 = sbr.rel (%p394) target = $region64
        $region63: #{tpu_custom_call.1} parent=47 // pred_region
          %398 = dma.done [#allocation9], 512
        $region64: #{tpu_custom_call.1} parent=47 // pred_fallthru
          _
        %s399 = sand.u32 %s54, 1
        %s400 = scalar_lea.sflag [#allocation3], %s399
        %s401 = sand.u32 %s54, 1
        %s402 = smul.addr %s401, 8
        %s403 = scalar_lea.vmem [#allocation2], %s402
        %p404 = pneg %p67
        %p405 = pneg %p64
        %p406 = pneg %p88
        %p407 = pneg %p85
        %p408 = pneg %p109
        %p409 = pneg %p106
        %p410 = pneg %p130
        %p411 = pneg %p127
        %p412 = pneg %p151
        %p413 = pneg %p148
        %p414 = pneg %p172
        %p415 = pneg %p169
        %p416 = pneg %p193
        %p417 = pneg %p190
        %p418 = pneg %p221
        %p419 = pneg %p218
        %s420 = sand.u32 %s208, 1
        %s421 = scalar_lea.sflag [#allocation4], %s420
        %s422 = sand.u32 %s208, 1
        %s423 = smul.addr %s422, 32
        %s424 = scalar_lea.vmem [#allocation10], %s423
        %p425 = pneg %p249
        %p426 = pneg %p246
        %s427 = sand.u32 %s32, 1
        %s428 = scalar_lea.sflag [#allocation12], %s427
        %s429 = sand.u32 %s236, 1
        %s430 = smul.addr %s429, 32
        %s431 = scalar_lea.vmem [#allocation11], %s430
        %p432 = pneg %p277
        %p433 = pneg %p274
        %s434 = sand.u32 %s32, 1
        %s435 = scalar_lea.sflag [#allocation12], %s434
        %s436 = sand.u32 %s264, 1
        %s437 = smul.addr %s436, 32
        %s438 = scalar_lea.vmem [#allocation13], %s437
        %v439 = vld [vmem:[%s378] sm:$0xff]
        %v440 = vld [vmem:[#allocation5] sm:$0xff]
        %v441 = vld [vmem:[#allocation5 + $0x8] sm:$0xff]
        %v442 = vld [vmem:[#allocation5 + $0x10] sm:$0xff]
        %v443 = vld [vmem:[#allocation5 + $0x18] sm:$0xff]
        %v444 = vld [vmem:[%s4] sm:$0x1]
        %v446 = vperm.slane %v444, 0
        %vm448 = vcmask 261120
        %v450 = vsel %vm448, %v439, 0
        %452 = vmatpush.msra.mxu0 0.0
        %453 = vmatpush.msra.mxu0 0.0
        %454 = vmatpush.msra.mxu0 0.0
        %455 = vmatpush.msra.mxu0 0.0
        %456 = vmatpush.msra.mxu0 0.0
        %457 = vmatpush.msra.mxu0 0.0
        %458 = vmatpush.msra.mxu0 0.0
        %459 = vmatpush.msra.mxu0 0.0
        %460 = vmatpush.msra.mxu0 0.0
        %461 = vmatpush.msra.mxu0 0.0
        %462 = vmatpush.msra.mxu0 0.0
        %463 = vmatpush.msra.mxu0 0.0
        %464 = vmatpush.msra.mxu0 %v443
        %465 = vmatpush.msra.mxu0 %v442
        %466 = vmatpush.msra.mxu0 %v441
        %467 = vmatpush.msra.mxu0 %v440
        %468 = vmatmul.f32.gmra.mxu0 %v450
        %v469 = vpop.f32.mrf.mxu0
        %v470 = vadd.f32 %v446, %v469
        %471 = vdwg.mxu0
        %v472 = vld [vmem:[#allocation7] sm:$0xff]
        %v473 = vld [vmem:[#allocation7 + $0x8] sm:$0xff]
        %v474 = vld [vmem:[#allocation7 + $0x10] sm:$0xff]
        %v475 = vld [vmem:[#allocation7 + $0x18] sm:$0xff]
        %v476 = vld [vmem:[%s5] sm:$0x1]
        %v478 = vperm.slane %v476, 0
        %480 = vmatpush.msra.mxu0 0.0
        %481 = vmatpush.msra.mxu0 0.0
        %482 = vmatpush.msra.mxu0 0.0
        %483 = vmatpush.msra.mxu0 0.0
        %484 = vmatpush.msra.mxu0 0.0
        %485 = vmatpush.msra.mxu0 0.0
        %486 = vmatpush.msra.mxu0 0.0
        %487 = vmatpush.msra.mxu0 0.0
        %488 = vmatpush.msra.mxu0 0.0
        %489 = vmatpush.msra.mxu0 0.0
        %490 = vmatpush.msra.mxu0 0.0
        %491 = vmatpush.msra.mxu0 0.0
        %492 = vmatpush.msra.mxu0 %v475
        %493 = vmatpush.msra.mxu0 %v474
        %494 = vmatpush.msra.mxu0 %v473
        %495 = vmatpush.msra.mxu0 %v472
        %496 = vmatmul.f32.gmra.mxu0 %v450
        %v497 = vpop.f32.mrf.mxu0
        %v498 = vadd.f32 %v478, %v497
        %499 = vdwg.mxu0
        %v500 = vld [vmem:[#allocation8] sm:$0xff]
        %v501 = vld [vmem:[#allocation8 + $0x8] sm:$0xff]
        %v502 = vld [vmem:[#allocation8 + $0x10] sm:$0xff]
        %v503 = vld [vmem:[#allocation8 + $0x18] sm:$0xff]
        %v504 = vld [vmem:[%s6] sm:$0x1]
        %v506 = vperm.slane %v504, 0
        %508 = vmatpush.msra.mxu0 0.0
        %509 = vmatpush.msra.mxu0 0.0
        %510 = vmatpush.msra.mxu0 0.0
        %511 = vmatpush.msra.mxu0 0.0
        %512 = vmatpush.msra.mxu0 0.0
        %513 = vmatpush.msra.mxu0 0.0
        %514 = vmatpush.msra.mxu0 0.0
        %515 = vmatpush.msra.mxu0 0.0
        %516 = vmatpush.msra.mxu0 0.0
        %517 = vmatpush.msra.mxu0 0.0
        %518 = vmatpush.msra.mxu0 0.0
        %519 = vmatpush.msra.mxu0 0.0
        %520 = vmatpush.msra.mxu0 %v503
        %521 = vmatpush.msra.mxu0 %v502
        %522 = vmatpush.msra.mxu0 %v501
        %523 = vmatpush.msra.mxu0 %v500
        %524 = vmatmul.f32.gmra.mxu0 %v450
        %v525 = vpop.f32.mrf.mxu0
        %v526 = vadd.f32 %v506, %v525
        %527 = vdwg.mxu0
        %vm528 = vcmask 64512
        %529 = vst.msk [vmem:[%s424] sm:$0xff] %vm528, %v470
        %530 = vst.msk [vmem:[%s431] sm:$0xff] %vm528, %v498
        %531 = vst.msk [vmem:[%s438] sm:$0xff] %vm528, %v526
        %533 = vrot.lane.b32.xlu0 %v470, 120
        %v534 = vpop.permute.xlu0 %533
        %s536 = scalar_lea.vmem %s424, 8 [#allocation10]
        %537 = vst.msk [vmem:[%s536] sm:$0xff] %vm528, %v534
        %539 = vrot.lane.b32.xlu0 %v498, 120
        %v540 = vpop.permute.xlu0 %539
        %s542 = scalar_lea.vmem %s431, 8 [#allocation11]
        %543 = vst.msk [vmem:[%s542] sm:$0xff] %vm528, %v540
        %545 = vrot.lane.b32.xlu0 %v526, 120
        %v546 = vpop.permute.xlu0 %545
        %s548 = scalar_lea.vmem %s438, 8 [#allocation13]
        %549 = vst.msk [vmem:[%s548] sm:$0xff] %vm528, %v546
        %550 = vrot.lane.b32.xlu0 %v470, 112
        %v551 = vpop.permute.xlu0 %550
        %s553 = scalar_lea.vmem %s424, 16 [#allocation10]
        %554 = vst.msk [vmem:[%s553] sm:$0xff] %vm528, %v551
        %555 = vrot.lane.b32.xlu0 %v498, 112
        %v556 = vpop.permute.xlu0 %555
        %s558 = scalar_lea.vmem %s431, 16 [#allocation11]
        %559 = vst.msk [vmem:[%s558] sm:$0xff] %vm528, %v556
        %560 = vrot.lane.b32.xlu0 %v526, 112
        %v561 = vpop.permute.xlu0 %560
        %s563 = scalar_lea.vmem %s438, 16 [#allocation13]
        %564 = vst.msk [vmem:[%s563] sm:$0xff] %vm528, %v561
        %565 = vrot.lane.b32.xlu0 %v470, 104
        %v566 = vpop.permute.xlu0 %565
        %s568 = scalar_lea.vmem %s424, 24 [#allocation10]
        %569 = vst.msk [vmem:[%s568] sm:$0xff] %vm528, %v566
        %570 = vrot.lane.b32.xlu0 %v498, 104
        %v571 = vpop.permute.xlu0 %570
        %s573 = scalar_lea.vmem %s431, 24 [#allocation11]
        %574 = vst.msk [vmem:[%s573] sm:$0xff] %vm528, %v571
        %575 = vrot.lane.b32.xlu0 %v526, 104
        %v576 = vpop.permute.xlu0 %575
        %s578 = scalar_lea.vmem %s438, 24 [#allocation13]
        %579 = vst.msk [vmem:[%s578] sm:$0xff] %vm528, %v576
        %s580 = sand.u32 %s208, 1
        %s581 = scalar_lea.sflag [#allocation4], %s580
        %s582 = sand.u32 %s208, 1
        %s583 = smul.addr %s582, 32
        %s584 = scalar_lea.vmem [#allocation10], %s583
        %s585 = sand.u32 %s32, 1
        %s586 = scalar_lea.sflag [#allocation12], %s585
        %s587 = sand.u32 %s236, 1
        %s588 = smul.addr %s587, 32
        %s589 = scalar_lea.vmem [#allocation11], %s588
        %s590 = sand.u32 %s32, 1
        %s591 = scalar_lea.sflag [#allocation12], %s590
        %s592 = sand.u32 %s264, 1
        %s593 = smul.addr %s592, 32
        %s594 = scalar_lea.vmem [#allocation13], %s593
        // Predicated region
        $region65: #{tpu_custom_call.1} parent=47 // pred_check
          %p595 = pneg %p218
        $region66: #{tpu_custom_call.1} parent=47 // pred_check_branch
          %597 = sbr.rel (%p595) target = $region68
        $region67: #{tpu_custom_call.1} parent=47 // pred_region
          %599 = vsyncadd %s581, 0
          %s600 = smul.addr %s36, 4
          %s601 = sadd.s32 %s37, %s600
          %s602 = smul.addr %s601, 8
          %s603 = scalar_lea.hbm %s7, %s602
          %s604 = sshll.u32 %s584, 4
          %s605 = int_to_ptr.vmem [resolvable:$true] %s604
          %s606 = sshll.u32 %s603, 4
          %s607 = int_to_ptr.hbm [resolvable:$true] %s606
          %612 = dma.vmem_to_hbm [thread:$0]  %s605, 512, %s607, %s581, 128, 128, 8
        $region68: #{tpu_custom_call.1} parent=47 // pred_fallthru
          _
        // Predicated region
        $region69: #{tpu_custom_call.1} parent=47 // pred_check
          %p613 = pneg %p246
        $region70: #{tpu_custom_call.1} parent=47 // pred_check_branch
          %615 = sbr.rel (%p613) target = $region72
        $region71: #{tpu_custom_call.1} parent=47 // pred_region
          %617 = vsyncadd %s586, 0
          %s618 = smul.addr %s36, 4
          %s619 = sadd.s32 %s37, %s618
          %s620 = smul.addr %s619, 8
          %s621 = scalar_lea.hbm %s8, %s620
          %s622 = sshll.u32 %s589, 4
          %s623 = int_to_ptr.vmem [resolvable:$true] %s622
          %s624 = sshll.u32 %s621, 4
          %s625 = int_to_ptr.hbm [resolvable:$true] %s624
          %630 = dma.vmem_to_hbm [thread:$0]  %s623, 512, %s625, %s586, 128, 128, 8
        $region72: #{tpu_custom_call.1} parent=47 // pred_fallthru
          _
        // Predicated region
        $region73: #{tpu_custom_call.1} parent=47 // pred_check
          %p631 = pneg %p274
        $region74: #{tpu_custom_call.1} parent=47 // pred_check_branch
          %633 = sbr.rel (%p631) target = $region76
        $region75: #{tpu_custom_call.1} parent=47 // pred_region
          %635 = vsyncadd %s591, 0
          %s636 = smul.addr %s36, 4
          %s637 = sadd.s32 %s37, %s636
          %s638 = smul.addr %s637, 8
          %s639 = scalar_lea.hbm %s9, %s638
          %s640 = sshll.u32 %s594, 4
          %s641 = int_to_ptr.vmem [resolvable:$true] %s640
          %s642 = sshll.u32 %s639, 4
          %s643 = int_to_ptr.hbm [resolvable:$true] %s642
          %648 = dma.vmem_to_hbm [thread:$0]  %s641, 512, %s643, %s591, 128, 128, 8
        $region76: #{tpu_custom_call.1} parent=47 // pred_fallthru
          _
      $region48: #{tpu_custom_call.1} parent=5 // pred_fallthru
        _
      %p649 = scmp.le.s32.totalorder 2, %s27
      // Predicated region
      $region77: #{tpu_custom_call.1} parent=5 // pred_check
        %p650 = pneg %p649
      $region78: #{tpu_custom_call.1} parent=5 // pred_check_branch
        %652 = sbr.rel (%p650) target = $region80
      $region79: #{tpu_custom_call.1} parent=5 // pred_region
        %s653 = ssub.s32 %s27, 2
        // Predicated region
        $region81: #{tpu_custom_call.1} parent=79 // pred_check
          %p654 = pneg %p224
        $region82: #{tpu_custom_call.1} parent=79 // pred_check_branch
          %656 = sbr.rel (%p654) target = $region84
        $region83: #{tpu_custom_call.1} parent=79 // pred_region
          %s657 = sand.u32 %s209, 1
          %s658 = scalar_lea.sflag [#allocation4], %s657
          %s659 = sand.u32 %s209, 1
          %s660 = smul.addr %s659, 32
          %s661 = scalar_lea.vmem [#allocation10], %s660
          %663 = dma.done %s658, 512
        $region84: #{tpu_custom_call.1} parent=79 // pred_fallthru
          _
        // Predicated region
        $region85: #{tpu_custom_call.1} parent=79 // pred_check
          %p664 = pneg %p252
        $region86: #{tpu_custom_call.1} parent=79 // pred_check_branch
          %666 = sbr.rel (%p664) target = $region88
        $region87: #{tpu_custom_call.1} parent=79 // pred_region
          %s667 = sand.u32 %s33, 1
          %s668 = scalar_lea.sflag [#allocation12], %s667
          %s669 = sand.u32 %s237, 1
          %s670 = smul.addr %s669, 32
          %s671 = scalar_lea.vmem [#allocation11], %s670
          %673 = dma.done %s668, 512
        $region88: #{tpu_custom_call.1} parent=79 // pred_fallthru
          _
        // Predicated region
        $region89: #{tpu_custom_call.1} parent=79 // pred_check
          %p674 = pneg %p280
        $region90: #{tpu_custom_call.1} parent=79 // pred_check_branch
          %676 = sbr.rel (%p674) target = $region92
        $region91: #{tpu_custom_call.1} parent=79 // pred_region
          %s677 = sand.u32 %s33, 1
          %s678 = scalar_lea.sflag [#allocation12], %s677
          %s679 = sand.u32 %s265, 1
          %s680 = smul.addr %s679, 32
          %s681 = scalar_lea.vmem [#allocation13], %s680
          %683 = dma.done %s678, 512
        $region92: #{tpu_custom_call.1} parent=79 // pred_fallthru
          _
      $region80: #{tpu_custom_call.1} parent=5 // pred_fallthru
        _
    $region6: #{tpu_custom_call.1} parent=1 // loop_footer
      %s31 = sadd.s32 1, %s27
    $region7: #{tpu_custom_call.1} parent=1 // loop_footer_branch
      %26 = sbr.rel target = $region3
    $region8: #{tpu_custom_call.1} parent=1 // loop_exit
      _
    %684 = vsyncpa [#allocation3], 1
    %s685 = scalar_lea.sflag [#allocation3], 1
    %686 = vsyncpa %s685, 1
    %687 = vsyncpa [#allocation6], 1
    %688 = vsyncpa [#allocation9], 1
    %689 = vsyncpa [#allocation4], 1
    %s690 = scalar_lea.sflag [#allocation4], 1
    %691 = vsyncpa %s690, 1
    %692 = vsyncpa [#allocation12], 1
    %s693 = scalar_lea.sflag [#allocation12], 1
    %694 = vsyncpa %s693, 1

</llo_original>
